<compile_context>
chip_gen: v5e
topology: v5e:2x2
jax: 0.10.0
libtpu: 0.0.40
codegen_flags: <defaults>
</compile_context>

<pallas_src>
import jax
import jax.numpy as jnp
from jax.experimental import pallas as pl
from jax.experimental.pallas import tpu as pltpu

# ---- "config" (small, deterministic) ----------------------------------------
CONFIG = dict(
    length_seq=8,                 # input_sequence_length
    evo_input_embed_dim=4,        # C
    evo_input_length=8,           # D
    num_hidden_patch_embed=2,     # number of hidden ReLU+Linear blocks
    hidden_dim_patch_embed=32,    # H
    dropout=0.0,
)

B = 2
L = CONFIG["length_seq"]
H = CONFIG["hidden_dim_patch_embed"]
C = CONFIG["evo_input_embed_dim"]
D = CONFIG["evo_input_length"]
O = C * D
NUM_HIDDEN = CONFIG["num_hidden_patch_embed"]

LANE = 128
HP = LANE                         # lane-padded hidden width (32 -> 128); zero
                                  # padding is exact in f32
_HIGHEST = jax.lax.Precision.HIGHEST


def _round_up(n, m):
    return ((n + m - 1) // m) * m


def patch_embed_kernel(x_ref, w_in_ref, b_in_ref, w_h_ref, b_h_ref,
                       w_out_ref, b_out_pos_ref, o_ref):
    # Full f32 path (torch parity); MXU matmuls with f32 accumulation.
    h = jnp.dot(x_ref[...], w_in_ref[...],
                preferred_element_type=jnp.float32,
                precision=_HIGHEST) + b_in_ref[...]
    for i in range(NUM_HIDDEN):            # static unroll (NUM_HIDDEN is small)
        h = jnp.maximum(h, 0.0)
        h = jnp.dot(h, w_h_ref[i],
                    preferred_element_type=jnp.float32,
                    precision=_HIGHEST) + b_h_ref[i]
    h = jnp.maximum(h, 0.0)
    # Final bias already has pos_embed folded in.  Store is the true (TB, O)
    # width -> 4x less HBM writeback than a 128-padded f32 store.  (On v5e a
    # lane-packed (TB/4, 128) store would avoid the masked vst; not worth the
    # in-kernel repack here since the store slot is not the binding unit.)
    o_ref[...] = jnp.dot(h, w_out_ref[...],
                         preferred_element_type=jnp.float32,
                         precision=_HIGHEST) + b_out_pos_ref[...]


def prepare_params(w_in, b_in, w_h, b_h, w_out, b_out, pos_embed):
    """One-time parameter prep (call ONCE at init, not per forward call):
    fold pos_embed into the final bias and zero-pad the hidden width to the
    128-lane vreg width so hidden-layer loads/activations stay lane-dense."""
    # pos_embed (1, C, D) -> (1, C*D) row-major matches 'b (c d)' rearrange.
    b_out_pos = b_out + pos_embed.reshape(1, O)
    wp_in = jnp.zeros((L, HP), jnp.float32).at[:, :H].set(w_in)
    bp_in = jnp.zeros((1, HP), jnp.float32).at[:, :H].set(b_in)
    wp_h = jnp.zeros((NUM_HIDDEN, HP, HP), jnp.float32).at[:, :H, :H].set(w_h)
    bp_h = jnp.zeros((NUM_HIDDEN, 1, HP), jnp.float32).at[:, :, :H].set(b_h)
    wp_out = jnp.zeros((HP, O), jnp.float32).at[:H, :].set(w_out)
    return wp_in, bp_in, wp_h, bp_h, wp_out, b_out_pos


def _choose_row_tile(bx8):
    # Tiny batches: one exact tile (no padding waste, no extra grid steps).
    if bx8 < 512:
        return bx8
    # Large batches: big tiles (amortize ~0.35us/grid-step + DMA), capped at
    # 2048 rows and at ~half the batch so the grid has >= 2 steps (megacore).
    return min(2048, _round_up(pl.cdiv(bx8, 2), 8))


@jax.jit
def patch_embed(x, wp_in, bp_in, wp_h, bp_h, wp_out, bp_out):
    Bx = x.shape[0]
    bx8 = _round_up(Bx, 8)                 # sublane alignment only (not TB!)
    xp = x if bx8 == Bx else jnp.zeros((bx8, L), x.dtype).at[:Bx].set(x)

    TB = _choose_row_tile(bx8)
    grid = (pl.cdiv(bx8, TB),)             # ragged last tile: rows independent

    in_specs = [
        pl.BlockSpec((TB, L), lambda i: (i, 0)),                    # x tile
        pl.BlockSpec((L, HP), lambda i: (0, 0)),                    # w_in
        pl.BlockSpec((1, HP), lambda i: (0, 0)),                    # b_in
        pl.BlockSpec((NUM_HIDDEN, HP, HP), lambda i: (0, 0, 0)),    # w_h
        pl.BlockSpec((NUM_HIDDEN, 1, HP), lambda i: (0, 0, 0)),     # b_h
        pl.BlockSpec((HP, O), lambda i: (0, 0)),                    # w_out
        pl.BlockSpec((1, O), lambda i: (0, 0)),                     # b_out + pos
    ]
    out_specs = pl.BlockSpec((TB, O), lambda i: (i, 0))             # true width

    # Advisory cost on TRUE (unpadded) dims.
    flops = 2 * Bx * (L * H + NUM_HIDDEN * H * H + H * O)
    bytes_accessed = (Bx * L * 4
                      + (wp_in.size + wp_h.size + wp_out.size
                         + bp_in.size + bp_h.size + bp_out.size) * 4
                      + Bx * O * 4)
    cost = pl.CostEstimate(flops=flops, transcendentals=0,
                           bytes_accessed=bytes_accessed)

    out = pl.pallas_call(
        patch_embed_kernel,
        out_shape=jax.ShapeDtypeStruct((bx8, O), jnp.float32),
        grid=grid,
        in_specs=in_specs,
        out_specs=out_specs,
        compiler_params=pltpu.CompilerParams(
            dimension_semantics=("parallel",)),
        cost_estimate=cost,
    )(xp, wp_in, bp_in, wp_h, bp_h, wp_out, bp_out)

    if bx8 != Bx:
        out = out[:Bx]
    return out.reshape(Bx, C, D)           # 'b (c d) -> b c d' is free


def init_params(key):
    ks = jax.random.split(key, 2 + 2 * NUM_HIDDEN + 2)
    idx = 0

    def nxt():
        nonlocal idx
        k = ks[idx]
        idx += 1
        return k

    # Weights stored as (in, out); biases as (1, out) for clean 2D VMEM layout.
    w_in = jax.random.normal(nxt(), (L, H), jnp.float32) * 0.1
    b_in = jax.random.normal(nxt(), (1, H), jnp.float32) * 0.01
    w_h = jnp.stack([jax.random.normal(nxt(), (H, H), jnp.float32) * 0.1
                     for _ in range(NUM_HIDDEN)])          # (NUM_HIDDEN, H, H)
    b_h = jnp.stack([jax.random.normal(nxt(), (1, H), jnp.float32) * 0.01
                     for _ in range(NUM_HIDDEN)])          # (NUM_HIDDEN, 1, H)
    w_out = jax.random.normal(nxt(), (H, O), jnp.float32) * 0.1
    b_out = jax.random.normal(nxt(), (1, O), jnp.float32) * 0.01
    # nn.Parameter(torch.zeros(1, C, D))
    pos_embed = jnp.zeros((1, C, D), jnp.float32)
    return w_in, b_in, w_h, b_h, w_out, b_out, pos_embed


def reference(x, w_in, b_in, w_h, b_h, w_out, b_out, pos_embed):
    # Plain f32 chain mirroring the PyTorch module (Linear -> [ReLU, Linear]*N
    # -> ReLU -> Linear -> rearrange -> + pos_embed).
    h = jnp.dot(x, w_in, precision=_HIGHEST) + b_in
    for i in range(NUM_HIDDEN):
        h = jnp.maximum(h, 0.0)
        h = jnp.dot(h, w_h[i], precision=_HIGHEST) + b_h[i]
    h = jnp.maximum(h, 0.0)
    out = jnp.dot(h, w_out, precision=_HIGHEST) + b_out
    return out.reshape(x.shape[0], C, D) + pos_embed


if __name__ == "__main__":
    key = jax.random.PRNGKey(0)
    k_x, k_p = jax.random.split(key)
    x = jax.random.normal(k_x, (B, L), jnp.float32)
    params = init_params(k_p)

    prepped = prepare_params(*params)      # one-time prep, hoisted off the hot path
    out = patch_embed(x, *prepped)
    jax.block_until_ready(out)

    ref = reference(x, *params)
    assert out.shape == (B, C, D), out.shape
    assert jnp.allclose(out, ref, atol=1e-4, rtol=1e-4), "mismatch vs reference"
    print("KERNEL_OK")
</pallas_src>

<mosaic_0001>
module attributes {stable_mosaic.version = 11 : i64} {
  func.func @patch_embed_kernel(%arg0: i32, %arg1: memref<8x8xf32, #tpu.memory_space<vmem>>, %arg2: memref<8x128xf32, #tpu.memory_space<vmem>>, %arg3: memref<1x128xf32, #tpu.memory_space<vmem>>, %arg4: memref<2x128x128xf32, #tpu.memory_space<vmem>>, %arg5: memref<2x1x128xf32, #tpu.memory_space<vmem>>, %arg6: memref<128x32xf32, #tpu.memory_space<vmem>>, %arg7: memref<1x32xf32, #tpu.memory_space<vmem>>, %arg8: memref<8x32xf32, #tpu.memory_space<vmem>>) attributes {dimension_semantics = [#tpu.dimension_semantics<parallel>], iteration_bounds = array<i64: 1>, scalar_prefetch = 0 : i64, scratch_operands = 0 : i64, tpu.core_type = #tpu.core_type<tc>, window_params = [{transform_indices = @transform_0, window_bounds = array<i64: 8, 8>}, {pipeline_mode = #tpu.pipeline_mode<synchronous>, transform_indices = @transform_1, window_bounds = array<i64: 8, 128>}, {pipeline_mode = #tpu.pipeline_mode<synchronous>, transform_indices = @transform_2, window_bounds = array<i64: 1, 128>}, {pipeline_mode = #tpu.pipeline_mode<synchronous>, transform_indices = @transform_3, window_bounds = array<i64: 2, 128, 128>}, {pipeline_mode = #tpu.pipeline_mode<synchronous>, transform_indices = @transform_4, window_bounds = array<i64: 2, 1, 128>}, {pipeline_mode = #tpu.pipeline_mode<synchronous>, transform_indices = @transform_5, window_bounds = array<i64: 128, 32>}, {pipeline_mode = #tpu.pipeline_mode<synchronous>, transform_indices = @transform_6, window_bounds = array<i64: 1, 32>}, {transform_indices = @transform_7, window_bounds = array<i64: 8, 32>}]} {
    %c0 = arith.constant 0 : index
    %c0_0 = arith.constant 0 : index
    %0 = vector.load %arg1[%c0, %c0_0] : memref<8x8xf32, #tpu.memory_space<vmem>>, vector<8x8xf32>
    %c0_1 = arith.constant 0 : index
    %c0_2 = arith.constant 0 : index
    %1 = vector.load %arg2[%c0_1, %c0_2] : memref<8x128xf32, #tpu.memory_space<vmem>>, vector<8x128xf32>
    %cst = arith.constant dense<0.000000e+00> : vector<8x128xf32>
    %2 = tpu.matmul %0, %1, %cst {dimension_numbers = #tpu.dot_dimension_numbers<[1], [0], [0], [1], [0, 0, 1, 1], [], []>, precision = #tpu.contract_precision<fp32>} : vector<8x8xf32>, vector<8x128xf32>, vector<8x128xf32> -> vector<8x128xf32>
    %c0_3 = arith.constant 0 : index
    %c0_4 = arith.constant 0 : index
    %3 = vector.load %arg3[%c0_3, %c0_4] : memref<1x128xf32, #tpu.memory_space<vmem>>, vector<1x128xf32>
    %4 = vector.broadcast %3 : vector<1x128xf32> to vector<8x128xf32>
    %5 = arith.addf %2, %4 : vector<8x128xf32>
    %cst_5 = arith.constant 0.000000e+00 : f32
    %6 = vector.broadcast %cst_5 : f32 to vector<8x128xf32>
    %7 = arith.maximumf %5, %6 : vector<8x128xf32>
    %c0_6 = arith.constant 0 : index
    %c0_7 = arith.constant 0 : index
    %c0_8 = arith.constant 0 : index
    %8 = vector.load %arg4[%c0_6, %c0_7, %c0_8] : memref<2x128x128xf32, #tpu.memory_space<vmem>>, vector<1x128x128xf32>
    %9 = vector.shape_cast %8 : vector<1x128x128xf32> to vector<128x128xf32>
    %cst_9 = arith.constant dense<0.000000e+00> : vector<8x128xf32>
    %10 = tpu.matmul %7, %9, %cst_9 {dimension_numbers = #tpu.dot_dimension_numbers<[1], [0], [0], [1], [0, 0, 1, 1], [], []>, precision = #tpu.contract_precision<fp32>} : vector<8x128xf32>, vector<128x128xf32>, vector<8x128xf32> -> vector<8x128xf32>
    %c0_10 = arith.constant 0 : index
    %c0_11 = arith.constant 0 : index
    %c0_12 = arith.constant 0 : index
    %11 = vector.load %arg5[%c0_10, %c0_11, %c0_12] : memref<2x1x128xf32, #tpu.memory_space<vmem>>, vector<1x1x128xf32>
    %12 = vector.shape_cast %11 : vector<1x1x128xf32> to vector<1x128xf32>
    %13 = vector.broadcast %12 : vector<1x128xf32> to vector<8x128xf32>
    %14 = arith.addf %10, %13 : vector<8x128xf32>
    %cst_13 = arith.constant 0.000000e+00 : f32
    %15 = vector.broadcast %cst_13 : f32 to vector<8x128xf32>
    %16 = arith.maximumf %14, %15 : vector<8x128xf32>
    %c1 = arith.constant 1 : index
    %c0_14 = arith.constant 0 : index
    %c0_15 = arith.constant 0 : index
    %17 = vector.load %arg4[%c1, %c0_14, %c0_15] : memref<2x128x128xf32, #tpu.memory_space<vmem>>, vector<1x128x128xf32>
    %18 = vector.shape_cast %17 : vector<1x128x128xf32> to vector<128x128xf32>
    %cst_16 = arith.constant dense<0.000000e+00> : vector<8x128xf32>
    %19 = tpu.matmul %16, %18, %cst_16 {dimension_numbers = #tpu.dot_dimension_numbers<[1], [0], [0], [1], [0, 0, 1, 1], [], []>, precision = #tpu.contract_precision<fp32>} : vector<8x128xf32>, vector<128x128xf32>, vector<8x128xf32> -> vector<8x128xf32>
    %c1_17 = arith.constant 1 : index
    %c0_18 = arith.constant 0 : index
    %c0_19 = arith.constant 0 : index
    %20 = vector.load %arg5[%c1_17, %c0_18, %c0_19] : memref<2x1x128xf32, #tpu.memory_space<vmem>>, vector<1x1x128xf32>
    %21 = vector.shape_cast %20 : vector<1x1x128xf32> to vector<1x128xf32>
    %22 = vector.broadcast %21 : vector<1x128xf32> to vector<8x128xf32>
    %23 = arith.addf %19, %22 : vector<8x128xf32>
    %cst_20 = arith.constant 0.000000e+00 : f32
    %24 = vector.broadcast %cst_20 : f32 to vector<8x128xf32>
    %25 = arith.maximumf %23, %24 : vector<8x128xf32>
    %c0_21 = arith.constant 0 : index
    %c0_22 = arith.constant 0 : index
    %26 = vector.load %arg6[%c0_21, %c0_22] : memref<128x32xf32, #tpu.memory_space<vmem>>, vector<128x32xf32>
    %cst_23 = arith.constant dense<0.000000e+00> : vector<8x32xf32>
    %27 = tpu.matmul %25, %26, %cst_23 {dimension_numbers = #tpu.dot_dimension_numbers<[1], [0], [0], [1], [0, 0, 1, 1], [], []>, precision = #tpu.contract_precision<fp32>} : vector<8x128xf32>, vector<128x32xf32>, vector<8x32xf32> -> vector<8x32xf32>
    %c0_24 = arith.constant 0 : index
    %c0_25 = arith.constant 0 : index
    %28 = vector.load %arg7[%c0_24, %c0_25] : memref<1x32xf32, #tpu.memory_space<vmem>>, vector<1x32xf32>
    %29 = vector.broadcast %28 : vector<1x32xf32> to vector<8x32xf32>
    %30 = arith.addf %27, %29 : vector<8x32xf32>
    %c0_26 = arith.constant 0 : index
    %c0_27 = arith.constant 0 : index
    %31 = vector.load %arg8[%c0_26, %c0_27] : memref<8x32xf32, #tpu.memory_space<vmem>>, vector<8x32xf32>
    tpu.vector_store %arg8[%c0_26, %c0_27], %30 {strides = array<i32>} : memref<8x32xf32, #tpu.memory_space<vmem>>, vector<8x32xf32>,
    return
  }
  func.func @transform_0(%arg0: i32) -> (i32, i32) {
    %c0_i32 = arith.constant 0 : i32
    %c0_i32_0 = arith.constant 0 : i32
    return %arg0, %c0_i32 : i32, i32
  }
  func.func @transform_1(%arg0: i32) -> (i32, i32) {
    %c0_i32 = arith.constant 0 : i32
    %c0_i32_0 = arith.constant 0 : i32
    %c0_i32_1 = arith.constant 0 : i32
    return %c0_i32, %c0_i32_0 : i32, i32
  }
  func.func @transform_2(%arg0: i32) -> (i32, i32) {
    %c0_i32 = arith.constant 0 : i32
    %c0_i32_0 = arith.constant 0 : i32
    %c0_i32_1 = arith.constant 0 : i32
    return %c0_i32, %c0_i32_0 : i32, i32
  }
  func.func @transform_3(%arg0: i32) -> (i32, i32, i32) {
    %c0_i32 = arith.constant 0 : i32
    %c0_i32_0 = arith.constant 0 : i32
    %c0_i32_1 = arith.constant 0 : i32
    %c0_i32_2 = arith.constant 0 : i32
    return %c0_i32, %c0_i32_0, %c0_i32_1 : i32, i32, i32
  }
  func.func @transform_4(%arg0: i32) -> (i32, i32, i32) {
    %c0_i32 = arith.constant 0 : i32
    %c0_i32_0 = arith.constant 0 : i32
    %c0_i32_1 = arith.constant 0 : i32
    %c0_i32_2 = arith.constant 0 : i32
    return %c0_i32, %c0_i32_0, %c0_i32_1 : i32, i32, i32
  }
  func.func @transform_5(%arg0: i32) -> (i32, i32) {
    %c0_i32 = arith.constant 0 : i32
    %c0_i32_0 = arith.constant 0 : i32
    %c0_i32_1 = arith.constant 0 : i32
    return %c0_i32, %c0_i32_0 : i32, i32
  }
  func.func @transform_6(%arg0: i32) -> (i32, i32) {
    %c0_i32 = arith.constant 0 : i32
    %c0_i32_0 = arith.constant 0 : i32
    %c0_i32_1 = arith.constant 0 : i32
    return %c0_i32, %c0_i32_0 : i32, i32
  }
  func.func @transform_7(%arg0: i32) -> (i32, i32) {
    %c0_i32 = arith.constant 0 : i32
    %c0_i32_0 = arith.constant 0 : i32
    return %arg0, %c0_i32 : i32, i32
  }
}

</mosaic_0001>

<llo_original>
// kernel: patch_embed.1
$region0: #{patch_embed.1}
  #allocation0 [shape = 'u32[]', space=smem, size = 0x4, offset = 0x4, fixed_abs, tag = 'smem constant byte address 0x4 - core index']
  #allocation1 [shape = 'u32[72,128]{1,0:T(1,128)}', space=vmem, size = 0x9000, scoped, tag = 'internal scratch']
  %s0 = inlined_call_operand.vmem [shape: f32[8,8], index: 0, kind: input, shape index: {}]
  %s1 = inlined_call_operand.vmem [shape: f32[8,128], index: 1, kind: input, shape index: {}]
  %s2 = inlined_call_operand.vmem [shape: f32[1,128], index: 2, kind: input, shape index: {}]
  %s3 = inlined_call_operand.hbm [shape: f32[2,128,128], index: 3, kind: input, shape index: {}]
  %s4 = inlined_call_operand.vmem [shape: f32[2,1,128], index: 4, kind: input, shape index: {}]
  %s5 = inlined_call_operand.vmem [shape: f32[128,32], index: 5, kind: input, shape index: {}]
  %s6 = inlined_call_operand.vmem [shape: f32[1,32], index: 6, kind: input, shape index: {}]
  %s7 = inlined_call_operand.vmem [shape: f32[8,32], index: 7, kind: output, shape index: {}]
  %s8 = sld [smem:[#allocation0]]
  $region42: #{patch_embed.1} parent=0
    _
  %s10 = ssub.s32 1, %s8
  %s11 = scalar_select 0, %s10, %s8
  $region1: #{patch_embed.1} parent=0
    #allocation2 [shape = 'u8[131072]{0}', space=vmem, size = 0x20000, scoped, tag = 'input window, operand 3, single buffered']
    #allocation3 [shape = 's32[1]{0}', space=sflag, size = 0x4, scoped, tag = 'scoped memory for patch_embed.1']
    %12 = vsyncpa [#allocation3], 0
    // Predicated region
    $region2: #{patch_embed.1} parent=1 // pred_check
      _
    $region3: #{patch_embed.1} parent=1 // pred_check_branch
      %14 = sbr.rel (0) target = $region5
    $region4: #{patch_embed.1} parent=1 // pred_region
      _
    $region5: #{patch_embed.1} parent=1 // pred_fallthru
      _
    // Predicated region
    $region6: #{patch_embed.1} parent=1 // pred_check
      _
    $region7: #{patch_embed.1} parent=1 // pred_check_branch
      %16 = sbr.rel (0) target = $region9
    $region8: #{patch_embed.1} parent=1 // pred_region
      _
    $region9: #{patch_embed.1} parent=1 // pred_fallthru
      _
    // Predicated region
    $region10: #{patch_embed.1} parent=1 // pred_check
      _
    $region11: #{patch_embed.1} parent=1 // pred_check_branch
      %18 = sbr.rel (0) target = $region13
    $region12: #{patch_embed.1} parent=1 // pred_region
      _
    $region13: #{patch_embed.1} parent=1 // pred_fallthru
      _
    // Predicated region
    $region14: #{patch_embed.1} parent=1 // pred_check
      _
    $region15: #{patch_embed.1} parent=1 // pred_check_branch
      %20 = sbr.rel (0) target = $region17
    $region16: #{patch_embed.1} parent=1 // pred_region
      %22 = vsyncadd [#allocation3], 0
      %s23 = sshll.u32 %s3, 4
      %s24 = int_to_ptr.hbm [resolvable:$true] %s23
      %s25 = sshll.u32 [#allocation2], 4
      %s26 = int_to_ptr.vmem [resolvable:$true] %s25
      %31 = dma.hbm_to_vmem [thread:$0]  %s24, 4096, %s26, [#allocation3], 128, 128, 8
    $region17: #{patch_embed.1} parent=1 // pred_fallthru
      _
    // Predicated region
    $region18: #{patch_embed.1} parent=1 // pred_check
      _
    $region19: #{patch_embed.1} parent=1 // pred_check_branch
      %33 = sbr.rel (0) target = $region21
    $region20: #{patch_embed.1} parent=1 // pred_region
      _
    $region21: #{patch_embed.1} parent=1 // pred_fallthru
      _
    // Predicated region
    $region22: #{patch_embed.1} parent=1 // pred_check
      _
    $region23: #{patch_embed.1} parent=1 // pred_check_branch
      %35 = sbr.rel (0) target = $region25
    $region24: #{patch_embed.1} parent=1 // pred_region
      _
    $region25: #{patch_embed.1} parent=1 // pred_fallthru
      _
    // Predicated region
    $region26: #{patch_embed.1} parent=1 // pred_check
      _
    $region27: #{patch_embed.1} parent=1 // pred_check_branch
      %37 = sbr.rel (0) target = $region29
    $region28: #{patch_embed.1} parent=1 // pred_region
      _
    $region29: #{patch_embed.1} parent=1 // pred_fallthru
      _
    // Predicated region
    $region30: #{patch_embed.1} parent=1 // pred_check
      _
    $region31: #{patch_embed.1} parent=1 // pred_check_branch
      %39 = sbr.rel (0) target = $region33
    $region32: #{patch_embed.1} parent=1 // pred_region
      %41 = dma.done [#allocation3], 4096
    $region33: #{patch_embed.1} parent=1 // pred_fallthru
      _
    %v42 = vld [vmem:[%s0] sm:$0xff]
    %v43 = vld [vmem:[%s1] sm:$0xff]
    %v44 = vld [vmem:[%s2] sm:$0x1]
    %v46 = vperm.slane %v44, 0
    %vm48 = vcmask 64512
    %v50 = vsel %vm48, %v42, 0
    %52 = vmatpush.msra.mxu0 0.0
    %53 = vmatpush.msra.mxu0 0.0
    %54 = vmatpush.msra.mxu0 0.0
    %55 = vmatpush.msra.mxu0 0.0
    %56 = vmatpush.msra.mxu0 0.0
    %57 = vmatpush.msra.mxu0 0.0
    %58 = vmatpush.msra.mxu0 0.0
    %59 = vmatpush.msra.mxu0 0.0
    %60 = vmatpush.msra.mxu0 0.0
    %61 = vmatpush.msra.mxu0 0.0
    %62 = vmatpush.msra.mxu0 0.0
    %63 = vmatpush.msra.mxu0 0.0
    %64 = vmatpush.msra.mxu0 0.0
    %65 = vmatpush.msra.mxu0 0.0
    %66 = vmatpush.msra.mxu0 0.0
    %v67 = vand.u32 %v43, 4294901760
    %68 = vmatpush.msra.mxu0 %v67
    %v69 = vand.u32 %v50, 4294901760
    %v70 = vsub.f32 %v50, %v69
    %v71 = vand.u32 %v70, 4294901760
    %v72 = vsub.f32 %v70, %v71
    %v73 = vand.u32 %v72, 4294901760
    %74 = vmatmul.f32.gmra.mxu0 %v73
    %v75 = vpop.f32.mrf.mxu0
    %v76 = vadd.f32 %v46, %v75
    %77 = vdwg.mxu0
    %78 = vmatpush.msra.mxu0 0.0
    %79 = vmatpush.msra.mxu0 0.0
    %80 = vmatpush.msra.mxu0 0.0
    %81 = vmatpush.msra.mxu0 0.0
    %82 = vmatpush.msra.mxu0 0.0
    %83 = vmatpush.msra.mxu0 0.0
    %84 = vmatpush.msra.mxu0 0.0
    %85 = vmatpush.msra.mxu0 0.0
    %86 = vmatpush.msra.mxu0 0.0
    %87 = vmatpush.msra.mxu0 0.0
    %88 = vmatpush.msra.mxu0 0.0
    %89 = vmatpush.msra.mxu0 0.0
    %90 = vmatpush.msra.mxu0 0.0
    %91 = vmatpush.msra.mxu0 0.0
    %92 = vmatpush.msra.mxu0 0.0
    %v93 = vand.u32 %v43, 4294901760
    %v94 = vsub.f32 %v43, %v93
    %v95 = vand.u32 %v94, 4294901760
    %v96 = vsub.f32 %v94, %v95
    %v97 = vand.u32 %v96, 4294901760
    %98 = vmatpush.msra.mxu0 %v97
    %v99 = vand.u32 %v50, 4294901760
    %100 = vmatmul.f32.gmra.mxu0 %v99
    %v101 = vpop.f32.mrf.mxu0
    %v102 = vadd.f32 %v76, %v101
    %103 = vdwg.mxu0
    %104 = vmatpush.msra.mxu0 0.0
    %105 = vmatpush.msra.mxu0 0.0
    %106 = vmatpush.msra.mxu0 0.0
    %107 = vmatpush.msra.mxu0 0.0
    %108 = vmatpush.msra.mxu0 0.0
    %109 = vmatpush.msra.mxu0 0.0
    %110 = vmatpush.msra.mxu0 0.0
    %111 = vmatpush.msra.mxu0 0.0
    %112 = vmatpush.msra.mxu0 0.0
    %113 = vmatpush.msra.mxu0 0.0
    %114 = vmatpush.msra.mxu0 0.0
    %115 = vmatpush.msra.mxu0 0.0
    %116 = vmatpush.msra.mxu0 0.0
    %117 = vmatpush.msra.mxu0 0.0
    %118 = vmatpush.msra.mxu0 0.0
    %v119 = vand.u32 %v43, 4294901760
    %v120 = vsub.f32 %v43, %v119
    %121 = vmatpush.msra.mxu0 %v120
    %v122 = vand.u32 %v50, 4294901760
    %v123 = vsub.f32 %v50, %v122
    %124 = vmatmul.f32.gmra.mxu0 %v123
    %v125 = vpop.f32.mrf.mxu0
    %v126 = vadd.f32 %v102, %v125
    %127 = vdwg.mxu0
    %128 = vmatpush.msra.mxu0 0.0
    %129 = vmatpush.msra.mxu0 0.0
    %130 = vmatpush.msra.mxu0 0.0
    %131 = vmatpush.msra.mxu0 0.0
    %132 = vmatpush.msra.mxu0 0.0
    %133 = vmatpush.msra.mxu0 0.0
    %134 = vmatpush.msra.mxu0 0.0
    %135 = vmatpush.msra.mxu0 0.0
    %136 = vmatpush.msra.mxu0 0.0
    %137 = vmatpush.msra.mxu0 0.0
    %138 = vmatpush.msra.mxu0 0.0
    %139 = vmatpush.msra.mxu0 0.0
    %140 = vmatpush.msra.mxu0 0.0
    %141 = vmatpush.msra.mxu0 0.0
    %142 = vmatpush.msra.mxu0 0.0
    %v143 = vand.u32 %v43, 4294901760
    %144 = vmatpush.msra.mxu0 %v143
    %v145 = vand.u32 %v50, 4294901760
    %v146 = vsub.f32 %v50, %v145
    %v147 = vand.u32 %v146, 4294901760
    %148 = vmatmul.f32.gmra.mxu0 %v147
    %v149 = vpop.f32.mrf.mxu0
    %v150 = vadd.f32 %v126, %v149
    %151 = vdwg.mxu0
    %152 = vmatpush.msra.mxu0 0.0
    %153 = vmatpush.msra.mxu0 0.0
    %154 = vmatpush.msra.mxu0 0.0
    %155 = vmatpush.msra.mxu0 0.0
    %156 = vmatpush.msra.mxu0 0.0
    %157 = vmatpush.msra.mxu0 0.0
    %158 = vmatpush.msra.mxu0 0.0
    %159 = vmatpush.msra.mxu0 0.0
    %160 = vmatpush.msra.mxu0 0.0
    %161 = vmatpush.msra.mxu0 0.0
    %162 = vmatpush.msra.mxu0 0.0
    %163 = vmatpush.msra.mxu0 0.0
    %164 = vmatpush.msra.mxu0 0.0
    %165 = vmatpush.msra.mxu0 0.0
    %166 = vmatpush.msra.mxu0 0.0
    %v167 = vand.u32 %v43, 4294901760
    %v168 = vsub.f32 %v43, %v167
    %v169 = vand.u32 %v168, 4294901760
    %170 = vmatpush.msra.mxu0 %v169
    %v171 = vand.u32 %v50, 4294901760
    %172 = vmatmul.f32.gmra.mxu0 %v171
    %v173 = vpop.f32.mrf.mxu0
    %v174 = vadd.f32 %v150, %v173
    %175 = vdwg.mxu0
    %176 = vmatpush.msra.mxu0 0.0
    %177 = vmatpush.msra.mxu0 0.0
    %178 = vmatpush.msra.mxu0 0.0
    %179 = vmatpush.msra.mxu0 0.0
    %180 = vmatpush.msra.mxu0 0.0
    %181 = vmatpush.msra.mxu0 0.0
    %182 = vmatpush.msra.mxu0 0.0
    %183 = vmatpush.msra.mxu0 0.0
    %184 = vmatpush.msra.mxu0 0.0
    %185 = vmatpush.msra.mxu0 0.0
    %186 = vmatpush.msra.mxu0 0.0
    %187 = vmatpush.msra.mxu0 0.0
    %188 = vmatpush.msra.mxu0 0.0
    %189 = vmatpush.msra.mxu0 0.0
    %190 = vmatpush.msra.mxu0 0.0
    %v191 = vand.u32 %v43, 4294901760
    %192 = vmatpush.msra.mxu0 %v191
    %v193 = vand.u32 %v50, 4294901760
    %194 = vmatmul.f32.gmra.mxu0 %v193
    %v195 = vpop.f32.mrf.mxu0
    %v196 = vadd.f32 %v174, %v195
    %197 = vdwg.mxu0
    %v198 = vmax.f32 %v196, 0.0
    %v199 = vld [vmem:[#allocation2] sm:$0xff]
    %v200 = vld [vmem:[#allocation2 + $0x8] sm:$0xff]
    %v201 = vld [vmem:[#allocation2 + $0x10] sm:$0xff]
    %v202 = vld [vmem:[#allocation2 + $0x18] sm:$0xff]
    %v203 = vld [vmem:[#allocation2 + $0x20] sm:$0xff]
    %v204 = vld [vmem:[#allocation2 + $0x28] sm:$0xff]
    %v205 = vld [vmem:[#allocation2 + $0x30] sm:$0xff]
    %v206 = vld [vmem:[#allocation2 + $0x38] sm:$0xff]
    %v207 = vld [vmem:[#allocation2 + $0x40] sm:$0xff]
    %v208 = vld [vmem:[#allocation2 + $0x48] sm:$0xff]
    %v209 = vld [vmem:[#allocation2 + $0x50] sm:$0xff]
    %v210 = vld [vmem:[#allocation2 + $0x58] sm:$0xff]
    %v211 = vld [vmem:[#allocation2 + $0x60] sm:$0xff]
    %v212 = vld [vmem:[#allocation2 + $0x68] sm:$0xff]
    %v213 = vld [vmem:[#allocation2 + $0x70] sm:$0xff]
    %v214 = vld [vmem:[#allocation2 + $0x78] sm:$0xff]
    %v215 = vld [vmem:[%s4] sm:$0x1]
    %v217 = vperm.slane %v215, 0
    %v219 = vand.u32 %v214, 4294901760
    %220 = vmatpush.msra.mxu0 %v219
    %v221 = vand.u32 %v213, 4294901760
    %222 = vmatpush.msra.mxu0 %v221
    %v223 = vand.u32 %v212, 4294901760
    %224 = vmatpush.msra.mxu0 %v223
    %v225 = vand.u32 %v211, 4294901760
    %226 = vmatpush.msra.mxu0 %v225
    %v227 = vand.u32 %v210, 4294901760
    %228 = vmatpush.msra.mxu0 %v227
    %v229 = vand.u32 %v209, 4294901760
    %230 = vmatpush.msra.mxu0 %v229
    %v231 = vand.u32 %v208, 4294901760
    %232 = vmatpush.msra.mxu0 %v231
    %v233 = vand.u32 %v207, 4294901760
    %234 = vmatpush.msra.mxu0 %v233
    %v235 = vand.u32 %v206, 4294901760
    %236 = vmatpush.msra.mxu0 %v235
    %v237 = vand.u32 %v205, 4294901760
    %238 = vmatpush.msra.mxu0 %v237
    %v239 = vand.u32 %v204, 4294901760
    %240 = vmatpush.msra.mxu0 %v239
    %v241 = vand.u32 %v203, 4294901760
    %242 = vmatpush.msra.mxu0 %v241
    %v243 = vand.u32 %v202, 4294901760
    %244 = vmatpush.msra.mxu0 %v243
    %v245 = vand.u32 %v201, 4294901760
    %246 = vmatpush.msra.mxu0 %v245
    %v247 = vand.u32 %v200, 4294901760
    %248 = vmatpush.msra.mxu0 %v247
    %v249 = vand.u32 %v199, 4294901760
    %250 = vmatpush.msra.mxu0 %v249
    %v251 = vand.u32 %v198, 4294901760
    %v252 = vsub.f32 %v198, %v251
    %v253 = vand.u32 %v252, 4294901760
    %v254 = vsub.f32 %v252, %v253
    %v255 = vand.u32 %v254, 4294901760
    %256 = vmatmul.f32.gmra.mxu0 %v255
    %v257 = vpop.f32.mrf.mxu0
    %v258 = vadd.f32 %v217, %v257
    %259 = vdwg.mxu0
    %v260 = vand.u32 %v214, 4294901760
    %v261 = vsub.f32 %v214, %v260
    %v262 = vand.u32 %v261, 4294901760
    %v263 = vsub.f32 %v261, %v262
    %v264 = vand.u32 %v263, 4294901760
    %265 = vmatpush.msra.mxu0 %v264
    %v266 = vand.u32 %v213, 4294901760
    %v267 = vsub.f32 %v213, %v266
    %v268 = vand.u32 %v267, 4294901760
    %v269 = vsub.f32 %v267, %v268
    %v270 = vand.u32 %v269, 4294901760
    %271 = vmatpush.msra.mxu0 %v270
    %v272 = vand.u32 %v212, 4294901760
    %v273 = vsub.f32 %v212, %v272
    %v274 = vand.u32 %v273, 4294901760
    %v275 = vsub.f32 %v273, %v274
    %v276 = vand.u32 %v275, 4294901760
    %277 = vmatpush.msra.mxu0 %v276
    %v278 = vand.u32 %v211, 4294901760
    %v279 = vsub.f32 %v211, %v278
    %v280 = vand.u32 %v279, 4294901760
    %v281 = vsub.f32 %v279, %v280
    %v282 = vand.u32 %v281, 4294901760
    %283 = vmatpush.msra.mxu0 %v282
    %v284 = vand.u32 %v210, 4294901760
    %v285 = vsub.f32 %v210, %v284
    %v286 = vand.u32 %v285, 4294901760
    %v287 = vsub.f32 %v285, %v286
    %v288 = vand.u32 %v287, 4294901760
    %289 = vmatpush.msra.mxu0 %v288
    %v290 = vand.u32 %v209, 4294901760
    %v291 = vsub.f32 %v209, %v290
    %v292 = vand.u32 %v291, 4294901760
    %v293 = vsub.f32 %v291, %v292
    %v294 = vand.u32 %v293, 4294901760
    %295 = vmatpush.msra.mxu0 %v294
    %v296 = vand.u32 %v208, 4294901760
    %v297 = vsub.f32 %v208, %v296
    %v298 = vand.u32 %v297, 4294901760
    %v299 = vsub.f32 %v297, %v298
    %v300 = vand.u32 %v299, 4294901760
    %301 = vmatpush.msra.mxu0 %v300
    %v302 = vand.u32 %v207, 4294901760
    %v303 = vsub.f32 %v207, %v302
    %v304 = vand.u32 %v303, 4294901760
    %v305 = vsub.f32 %v303, %v304
    %v306 = vand.u32 %v305, 4294901760
    %307 = vmatpush.msra.mxu0 %v306
    %v308 = vand.u32 %v206, 4294901760
    %v309 = vsub.f32 %v206, %v308
    %v310 = vand.u32 %v309, 4294901760
    %v311 = vsub.f32 %v309, %v310
    %v312 = vand.u32 %v311, 4294901760
    %313 = vmatpush.msra.mxu0 %v312
    %v314 = vand.u32 %v205, 4294901760
    %v315 = vsub.f32 %v205, %v314
    %v316 = vand.u32 %v315, 4294901760
    %v317 = vsub.f32 %v315, %v316
    %v318 = vand.u32 %v317, 4294901760
    %319 = vmatpush.msra.mxu0 %v318
    %v320 = vand.u32 %v204, 4294901760
    %v321 = vsub.f32 %v204, %v320
    %v322 = vand.u32 %v321, 4294901760
    %v323 = vsub.f32 %v321, %v322
    %v324 = vand.u32 %v323, 4294901760
    %325 = vmatpush.msra.mxu0 %v324
    %v326 = vand.u32 %v203, 4294901760
    %v327 = vsub.f32 %v203, %v326
    %v328 = vand.u32 %v327, 4294901760
    %v329 = vsub.f32 %v327, %v328
    %v330 = vand.u32 %v329, 4294901760
    %331 = vmatpush.msra.mxu0 %v330
    %v332 = vand.u32 %v202, 4294901760
    %v333 = vsub.f32 %v202, %v332
    %v334 = vand.u32 %v333, 4294901760
    %v335 = vsub.f32 %v333, %v334
    %v336 = vand.u32 %v335, 4294901760
    %337 = vmatpush.msra.mxu0 %v336
    %v338 = vand.u32 %v201, 4294901760
    %v339 = vsub.f32 %v201, %v338
    %v340 = vand.u32 %v339, 4294901760
    %v341 = vsub.f32 %v339, %v340
    %v342 = vand.u32 %v341, 4294901760
    %343 = vmatpush.msra.mxu0 %v342
    %v344 = vand.u32 %v200, 4294901760
    %v345 = vsub.f32 %v200, %v344
    %v346 = vand.u32 %v345, 4294901760
    %v347 = vsub.f32 %v345, %v346
    %v348 = vand.u32 %v347, 4294901760
    %349 = vmatpush.msra.mxu0 %v348
    %v350 = vand.u32 %v199, 4294901760
    %v351 = vsub.f32 %v199, %v350
    %v352 = vand.u32 %v351, 4294901760
    %v353 = vsub.f32 %v351, %v352
    %v354 = vand.u32 %v353, 4294901760
    %355 = vmatpush.msra.mxu0 %v354
    %v356 = vand.u32 %v198, 4294901760
    %357 = vmatmul.f32.gmra.mxu0 %v356
    %v358 = vpop.f32.mrf.mxu0
    %v359 = vadd.f32 %v258, %v358
    %360 = vdwg.mxu0
    %v361 = vand.u32 %v214, 4294901760
    %v362 = vsub.f32 %v214, %v361
    %363 = vmatpush.msra.mxu0 %v362
    %v364 = vand.u32 %v213, 4294901760
    %v365 = vsub.f32 %v213, %v364
    %366 = vmatpush.msra.mxu0 %v365
    %v367 = vand.u32 %v212, 4294901760
    %v368 = vsub.f32 %v212, %v367
    %369 = vmatpush.msra.mxu0 %v368
    %v370 = vand.u32 %v211, 4294901760
    %v371 = vsub.f32 %v211, %v370
    %372 = vmatpush.msra.mxu0 %v371
    %v373 = vand.u32 %v210, 4294901760
    %v374 = vsub.f32 %v210, %v373
    %375 = vmatpush.msra.mxu0 %v374
    %v376 = vand.u32 %v209, 4294901760
    %v377 = vsub.f32 %v209, %v376
    %378 = vmatpush.msra.mxu0 %v377
    %v379 = vand.u32 %v208, 4294901760
    %v380 = vsub.f32 %v208, %v379
    %381 = vmatpush.msra.mxu0 %v380
    %v382 = vand.u32 %v207, 4294901760
    %v383 = vsub.f32 %v207, %v382
    %384 = vmatpush.msra.mxu0 %v383
    %v385 = vand.u32 %v206, 4294901760
    %v386 = vsub.f32 %v206, %v385
    %387 = vmatpush.msra.mxu0 %v386
    %v388 = vand.u32 %v205, 4294901760
    %v389 = vsub.f32 %v205, %v388
    %390 = vmatpush.msra.mxu0 %v389
    %v391 = vand.u32 %v204, 4294901760
    %v392 = vsub.f32 %v204, %v391
    %393 = vmatpush.msra.mxu0 %v392
    %v394 = vand.u32 %v203, 4294901760
    %v395 = vsub.f32 %v203, %v394
    %396 = vmatpush.msra.mxu0 %v395
    %v397 = vand.u32 %v202, 4294901760
    %v398 = vsub.f32 %v202, %v397
    %399 = vmatpush.msra.mxu0 %v398
    %v400 = vand.u32 %v201, 4294901760
    %v401 = vsub.f32 %v201, %v400
    %402 = vmatpush.msra.mxu0 %v401
    %v403 = vand.u32 %v200, 4294901760
    %v404 = vsub.f32 %v200, %v403
    %405 = vmatpush.msra.mxu0 %v404
    %v406 = vand.u32 %v199, 4294901760
    %v407 = vsub.f32 %v199, %v406
    %408 = vmatpush.msra.mxu0 %v407
    %v409 = vand.u32 %v198, 4294901760
    %v410 = vsub.f32 %v198, %v409
    %411 = vmatmul.f32.gmra.mxu0 %v410
    %v412 = vpop.f32.mrf.mxu0
    %v413 = vadd.f32 %v359, %v412
    %414 = vdwg.mxu0
    %v415 = vand.u32 %v214, 4294901760
    %416 = vmatpush.msra.mxu0 %v415
    %v417 = vand.u32 %v213, 4294901760
    %418 = vmatpush.msra.mxu0 %v417
    %v419 = vand.u32 %v212, 4294901760
    %420 = vmatpush.msra.mxu0 %v419
    %v421 = vand.u32 %v211, 4294901760
    %422 = vmatpush.msra.mxu0 %v421
    %v423 = vand.u32 %v210, 4294901760
    %424 = vmatpush.msra.mxu0 %v423
    %v425 = vand.u32 %v209, 4294901760
    %426 = vmatpush.msra.mxu0 %v425
    %v427 = vand.u32 %v208, 4294901760
    %428 = vmatpush.msra.mxu0 %v427
    %v429 = vand.u32 %v207, 4294901760
    %430 = vmatpush.msra.mxu0 %v429
    %v431 = vand.u32 %v206, 4294901760
    %432 = vmatpush.msra.mxu0 %v431
    %v433 = vand.u32 %v205, 4294901760
    %434 = vmatpush.msra.mxu0 %v433
    %v435 = vand.u32 %v204, 4294901760
    %436 = vmatpush.msra.mxu0 %v435
    %v437 = vand.u32 %v203, 4294901760
    %438 = vmatpush.msra.mxu0 %v437
    %v439 = vand.u32 %v202, 4294901760
    %440 = vmatpush.msra.mxu0 %v439
    %v441 = vand.u32 %v201, 4294901760
    %442 = vmatpush.msra.mxu0 %v441
    %v443 = vand.u32 %v200, 4294901760
    %444 = vmatpush.msra.mxu0 %v443
    %v445 = vand.u32 %v199, 4294901760
    %446 = vmatpush.msra.mxu0 %v445
    %v447 = vand.u32 %v198, 4294901760
    %v448 = vsub.f32 %v198, %v447
    %v449 = vand.u32 %v448, 4294901760
    %450 = vmatmul.f32.gmra.mxu0 %v449
    %v451 = vpop.f32.mrf.mxu0
    %v452 = vadd.f32 %v413, %v451
    %453 = vdwg.mxu0
    %v454 = vand.u32 %v214, 4294901760
    %v455 = vsub.f32 %v214, %v454
    %v456 = vand.u32 %v455, 4294901760
    %457 = vmatpush.msra.mxu0 %v456
    %v458 = vand.u32 %v213, 4294901760
    %v459 = vsub.f32 %v213, %v458
    %v460 = vand.u32 %v459, 4294901760
    %461 = vmatpush.msra.mxu0 %v460
    %v462 = vand.u32 %v212, 4294901760
    %v463 = vsub.f32 %v212, %v462
    %v464 = vand.u32 %v463, 4294901760
    %465 = vmatpush.msra.mxu0 %v464
    %v466 = vand.u32 %v211, 4294901760
    %v467 = vsub.f32 %v211, %v466
    %v468 = vand.u32 %v467, 4294901760
    %469 = vmatpush.msra.mxu0 %v468
    %v470 = vand.u32 %v210, 4294901760
    %v471 = vsub.f32 %v210, %v470
    %v472 = vand.u32 %v471, 4294901760
    %473 = vmatpush.msra.mxu0 %v472
    %v474 = vand.u32 %v209, 4294901760
    %v475 = vsub.f32 %v209, %v474
    %v476 = vand.u32 %v475, 4294901760
    %477 = vmatpush.msra.mxu0 %v476
    %v478 = vand.u32 %v208, 4294901760
    %v479 = vsub.f32 %v208, %v478
    %v480 = vand.u32 %v479, 4294901760
    %481 = vmatpush.msra.mxu0 %v480
    %v482 = vand.u32 %v207, 4294901760
    %v483 = vsub.f32 %v207, %v482
    %v484 = vand.u32 %v483, 4294901760
    %485 = vmatpush.msra.mxu0 %v484
    %v486 = vand.u32 %v206, 4294901760
    %v487 = vsub.f32 %v206, %v486
    %v488 = vand.u32 %v487, 4294901760
    %489 = vmatpush.msra.mxu0 %v488
    %v490 = vand.u32 %v205, 4294901760
    %v491 = vsub.f32 %v205, %v490
    %v492 = vand.u32 %v491, 4294901760
    %493 = vmatpush.msra.mxu0 %v492
    %v494 = vand.u32 %v204, 4294901760
    %v495 = vsub.f32 %v204, %v494
    %v496 = vand.u32 %v495, 4294901760
    %497 = vmatpush.msra.mxu0 %v496
    %v498 = vand.u32 %v203, 4294901760
    %v499 = vsub.f32 %v203, %v498
    %v500 = vand.u32 %v499, 4294901760
    %501 = vmatpush.msra.mxu0 %v500
    %v502 = vand.u32 %v202, 4294901760
    %v503 = vsub.f32 %v202, %v502
    %v504 = vand.u32 %v503, 4294901760
    %505 = vmatpush.msra.mxu0 %v504
    %v506 = vand.u32 %v201, 4294901760
    %v507 = vsub.f32 %v201, %v506
    %v508 = vand.u32 %v507, 4294901760
    %509 = vmatpush.msra.mxu0 %v508
    %v510 = vand.u32 %v200, 4294901760
    %v511 = vsub.f32 %v200, %v510
    %v512 = vand.u32 %v511, 4294901760
    %513 = vmatpush.msra.mxu0 %v512
    %v514 = vand.u32 %v199, 4294901760
    %v515 = vsub.f32 %v199, %v514
    %v516 = vand.u32 %v515, 4294901760
    %517 = vmatpush.msra.mxu0 %v516
    %v518 = vand.u32 %v198, 4294901760
    %519 = vmatmul.f32.gmra.mxu0 %v518
    %v520 = vpop.f32.mrf.mxu0
    %v521 = vadd.f32 %v452, %v520
    %522 = vdwg.mxu0
    %v523 = vand.u32 %v214, 4294901760
    %524 = vmatpush.msra.mxu0 %v523
    %v525 = vand.u32 %v213, 4294901760
    %526 = vmatpush.msra.mxu0 %v525
    %v527 = vand.u32 %v212, 4294901760
    %528 = vmatpush.msra.mxu0 %v527
    %v529 = vand.u32 %v211, 4294901760
    %530 = vmatpush.msra.mxu0 %v529
    %v531 = vand.u32 %v210, 4294901760
    %532 = vmatpush.msra.mxu0 %v531
    %v533 = vand.u32 %v209, 4294901760
    %534 = vmatpush.msra.mxu0 %v533
    %v535 = vand.u32 %v208, 4294901760
    %536 = vmatpush.msra.mxu0 %v535
    %v537 = vand.u32 %v207, 4294901760
    %538 = vmatpush.msra.mxu0 %v537
    %v539 = vand.u32 %v206, 4294901760
    %540 = vmatpush.msra.mxu0 %v539
    %v541 = vand.u32 %v205, 4294901760
    %542 = vmatpush.msra.mxu0 %v541
    %v543 = vand.u32 %v204, 4294901760
    %544 = vmatpush.msra.mxu0 %v543
    %v545 = vand.u32 %v203, 4294901760
    %546 = vmatpush.msra.mxu0 %v545
    %v547 = vand.u32 %v202, 4294901760
    %548 = vmatpush.msra.mxu0 %v547
    %v549 = vand.u32 %v201, 4294901760
    %550 = vmatpush.msra.mxu0 %v549
    %v551 = vand.u32 %v200, 4294901760
    %552 = vmatpush.msra.mxu0 %v551
    %v553 = vand.u32 %v199, 4294901760
    %554 = vmatpush.msra.mxu0 %v553
    %v555 = vand.u32 %v198, 4294901760
    %556 = vmatmul.f32.gmra.mxu0 %v555
    %v557 = vpop.f32.mrf.mxu0
    %v558 = vadd.f32 %v521, %v557
    %559 = vdwg.mxu0
    %v560 = vmax.f32 %v558, 0.0
    %s561 = scalar_lea.vmem [#allocation2], 128
    %v562 = vld [vmem:[%s561] sm:$0xff]
    %v563 = vld [vmem:[%s561 + $0x8] sm:$0xff]
    %v564 = vld [vmem:[%s561 + $0x10] sm:$0xff]
    %v565 = vld [vmem:[%s561 + $0x18] sm:$0xff]
    %v566 = vld [vmem:[%s561 + $0x20] sm:$0xff]
    %v567 = vld [vmem:[%s561 + $0x28] sm:$0xff]
    %v568 = vld [vmem:[%s561 + $0x30] sm:$0xff]
    %v569 = vld [vmem:[%s561 + $0x38] sm:$0xff]
    %v570 = vld [vmem:[%s561 + $0x40] sm:$0xff]
    %v571 = vld [vmem:[%s561 + $0x48] sm:$0xff]
    %v572 = vld [vmem:[%s561 + $0x50] sm:$0xff]
    %v573 = vld [vmem:[%s561 + $0x58] sm:$0xff]
    %v574 = vld [vmem:[%s561 + $0x60] sm:$0xff]
    %v575 = vld [vmem:[%s561 + $0x68] sm:$0xff]
    %v576 = vld [vmem:[%s561 + $0x70] sm:$0xff]
    %v577 = vld [vmem:[%s561 + $0x78] sm:$0xff]
    %s578 = scalar_lea.vmem %s4, 1
    %v579 = vld [vmem:[%s578] sm:$0x1]
    %v581 = vperm.slane %v579, 0
    %v583 = vand.u32 %v577, 4294901760
    %584 = vmatpush.msra.mxu0 %v583
    %v585 = vand.u32 %v576, 4294901760
    %586 = vmatpush.msra.mxu0 %v585
    %v587 = vand.u32 %v575, 4294901760
    %588 = vmatpush.msra.mxu0 %v587
    %v589 = vand.u32 %v574, 4294901760
    %590 = vmatpush.msra.mxu0 %v589
    %v591 = vand.u32 %v573, 4294901760
    %592 = vmatpush.msra.mxu0 %v591
    %v593 = vand.u32 %v572, 4294901760
    %594 = vmatpush.msra.mxu0 %v593
    %v595 = vand.u32 %v571, 4294901760
    %596 = vmatpush.msra.mxu0 %v595
    %v597 = vand.u32 %v570, 4294901760
    %598 = vmatpush.msra.mxu0 %v597
    %v599 = vand.u32 %v569, 4294901760
    %600 = vmatpush.msra.mxu0 %v599
    %v601 = vand.u32 %v568, 4294901760
    %602 = vmatpush.msra.mxu0 %v601
    %v603 = vand.u32 %v567, 4294901760
    %604 = vmatpush.msra.mxu0 %v603
    %v605 = vand.u32 %v566, 4294901760
    %606 = vmatpush.msra.mxu0 %v605
    %v607 = vand.u32 %v565, 4294901760
    %608 = vmatpush.msra.mxu0 %v607
    %v609 = vand.u32 %v564, 4294901760
    %610 = vmatpush.msra.mxu0 %v609
    %v611 = vand.u32 %v563, 4294901760
    %612 = vmatpush.msra.mxu0 %v611
    %v613 = vand.u32 %v562, 4294901760
    %614 = vmatpush.msra.mxu0 %v613
    %v615 = vand.u32 %v560, 4294901760
    %v616 = vsub.f32 %v560, %v615
    %v617 = vand.u32 %v616, 4294901760
    %v618 = vsub.f32 %v616, %v617
    %v619 = vand.u32 %v618, 4294901760
    %620 = vmatmul.f32.gmra.mxu0 %v619
    %v621 = vpop.f32.mrf.mxu0
    %v622 = vadd.f32 %v581, %v621
    %623 = vdwg.mxu0
    %v624 = vand.u32 %v577, 4294901760
    %v625 = vsub.f32 %v577, %v624
    %v626 = vand.u32 %v625, 4294901760
    %v627 = vsub.f32 %v625, %v626
    %v628 = vand.u32 %v627, 4294901760
    %629 = vmatpush.msra.mxu0 %v628
    %v630 = vand.u32 %v576, 4294901760
    %v631 = vsub.f32 %v576, %v630
    %v632 = vand.u32 %v631, 4294901760
    %v633 = vsub.f32 %v631, %v632
    %v634 = vand.u32 %v633, 4294901760
    %635 = vmatpush.msra.mxu0 %v634
    %v636 = vand.u32 %v575, 4294901760
    %v637 = vsub.f32 %v575, %v636
    %v638 = vand.u32 %v637, 4294901760
    %v639 = vsub.f32 %v637, %v638
    %v640 = vand.u32 %v639, 4294901760
    %641 = vmatpush.msra.mxu0 %v640
    %v642 = vand.u32 %v574, 4294901760
    %v643 = vsub.f32 %v574, %v642
    %v644 = vand.u32 %v643, 4294901760
    %v645 = vsub.f32 %v643, %v644
    %v646 = vand.u32 %v645, 4294901760
    %647 = vmatpush.msra.mxu0 %v646
    %v648 = vand.u32 %v573, 4294901760
    %v649 = vsub.f32 %v573, %v648
    %v650 = vand.u32 %v649, 4294901760
    %v651 = vsub.f32 %v649, %v650
    %v652 = vand.u32 %v651, 4294901760
    %653 = vmatpush.msra.mxu0 %v652
    %v654 = vand.u32 %v572, 4294901760
    %v655 = vsub.f32 %v572, %v654
    %v656 = vand.u32 %v655, 4294901760
    %v657 = vsub.f32 %v655, %v656
    %v658 = vand.u32 %v657, 4294901760
    %659 = vmatpush.msra.mxu0 %v658
    %v660 = vand.u32 %v571, 4294901760
    %v661 = vsub.f32 %v571, %v660
    %v662 = vand.u32 %v661, 4294901760
    %v663 = vsub.f32 %v661, %v662
    %v664 = vand.u32 %v663, 4294901760
    %665 = vmatpush.msra.mxu0 %v664
    %v666 = vand.u32 %v570, 4294901760
    %v667 = vsub.f32 %v570, %v666
    %v668 = vand.u32 %v667, 4294901760
    %v669 = vsub.f32 %v667, %v668
    %v670 = vand.u32 %v669, 4294901760
    %671 = vmatpush.msra.mxu0 %v670
    %v672 = vand.u32 %v569, 4294901760
    %v673 = vsub.f32 %v569, %v672
    %v674 = vand.u32 %v673, 4294901760
    %v675 = vsub.f32 %v673, %v674
    %v676 = vand.u32 %v675, 4294901760
    %677 = vmatpush.msra.mxu0 %v676
    %v678 = vand.u32 %v568, 4294901760
    %v679 = vsub.f32 %v568, %v678
    %v680 = vand.u32 %v679, 4294901760
    %v681 = vsub.f32 %v679, %v680
    %v682 = vand.u32 %v681, 4294901760
    %683 = vmatpush.msra.mxu0 %v682
    %v684 = vand.u32 %v567, 4294901760
    %v685 = vsub.f32 %v567, %v684
    %v686 = vand.u32 %v685, 4294901760
    %v687 = vsub.f32 %v685, %v686
    %v688 = vand.u32 %v687, 4294901760
    %689 = vmatpush.msra.mxu0 %v688
    %v690 = vand.u32 %v566, 4294901760
    %v691 = vsub.f32 %v566, %v690
    %v692 = vand.u32 %v691, 4294901760
    %v693 = vsub.f32 %v691, %v692
    %v694 = vand.u32 %v693, 4294901760
    %695 = vmatpush.msra.mxu0 %v694
    %v696 = vand.u32 %v565, 4294901760
    %v697 = vsub.f32 %v565, %v696
    %v698 = vand.u32 %v697, 4294901760
    %v699 = vsub.f32 %v697, %v698
    %v700 = vand.u32 %v699, 4294901760
    %701 = vmatpush.msra.mxu0 %v700
    %v702 = vand.u32 %v564, 4294901760
    %v703 = vsub.f32 %v564, %v702
    %v704 = vand.u32 %v703, 4294901760
    %v705 = vsub.f32 %v703, %v704
    %v706 = vand.u32 %v705, 4294901760
    %707 = vmatpush.msra.mxu0 %v706
    %v708 = vand.u32 %v563, 4294901760
    %v709 = vsub.f32 %v563, %v708
    %v710 = vand.u32 %v709, 4294901760
    %v711 = vsub.f32 %v709, %v710
    %v712 = vand.u32 %v711, 4294901760
    %713 = vmatpush.msra.mxu0 %v712
    %v714 = vand.u32 %v562, 4294901760
    %v715 = vsub.f32 %v562, %v714
    %v716 = vand.u32 %v715, 4294901760
    %v717 = vsub.f32 %v715, %v716
    %v718 = vand.u32 %v717, 4294901760
    %719 = vmatpush.msra.mxu0 %v718
    %v720 = vand.u32 %v560, 4294901760
    %721 = vmatmul.f32.gmra.mxu0 %v720
    %v722 = vpop.f32.mrf.mxu0
    %v723 = vadd.f32 %v622, %v722
    %724 = vdwg.mxu0
    %v725 = vand.u32 %v577, 4294901760
    %v726 = vsub.f32 %v577, %v725
    %727 = vmatpush.msra.mxu0 %v726
    %v728 = vand.u32 %v576, 4294901760
    %v729 = vsub.f32 %v576, %v728
    %730 = vmatpush.msra.mxu0 %v729
    %v731 = vand.u32 %v575, 4294901760
    %v732 = vsub.f32 %v575, %v731
    %733 = vmatpush.msra.mxu0 %v732
    %v734 = vand.u32 %v574, 4294901760
    %v735 = vsub.f32 %v574, %v734
    %736 = vmatpush.msra.mxu0 %v735
    %v737 = vand.u32 %v573, 4294901760
    %v738 = vsub.f32 %v573, %v737
    %739 = vmatpush.msra.mxu0 %v738
    %v740 = vand.u32 %v572, 4294901760
    %v741 = vsub.f32 %v572, %v740
    %742 = vmatpush.msra.mxu0 %v741
    %v743 = vand.u32 %v571, 4294901760
    %v744 = vsub.f32 %v571, %v743
    %745 = vmatpush.msra.mxu0 %v744
    %v746 = vand.u32 %v570, 4294901760
    %v747 = vsub.f32 %v570, %v746
    %748 = vmatpush.msra.mxu0 %v747
    %v749 = vand.u32 %v569, 4294901760
    %v750 = vsub.f32 %v569, %v749
    %751 = vmatpush.msra.mxu0 %v750
    %v752 = vand.u32 %v568, 4294901760
    %v753 = vsub.f32 %v568, %v752
    %754 = vmatpush.msra.mxu0 %v753
    %v755 = vand.u32 %v567, 4294901760
    %v756 = vsub.f32 %v567, %v755
    %757 = vmatpush.msra.mxu0 %v756
    %v758 = vand.u32 %v566, 4294901760
    %v759 = vsub.f32 %v566, %v758
    %760 = vmatpush.msra.mxu0 %v759
    %v761 = vand.u32 %v565, 4294901760
    %v762 = vsub.f32 %v565, %v761
    %763 = vmatpush.msra.mxu0 %v762
    %v764 = vand.u32 %v564, 4294901760
    %v765 = vsub.f32 %v564, %v764
    %766 = vmatpush.msra.mxu0 %v765
    %v767 = vand.u32 %v563, 4294901760
    %v768 = vsub.f32 %v563, %v767
    %769 = vmatpush.msra.mxu0 %v768
    %v770 = vand.u32 %v562, 4294901760
    %v771 = vsub.f32 %v562, %v770
    %772 = vmatpush.msra.mxu0 %v771
    %v773 = vand.u32 %v560, 4294901760
    %v774 = vsub.f32 %v560, %v773
    %775 = vmatmul.f32.gmra.mxu0 %v774
    %v776 = vpop.f32.mrf.mxu0
    %v777 = vadd.f32 %v723, %v776
    %778 = vdwg.mxu0
    %v779 = vand.u32 %v577, 4294901760
    %780 = vmatpush.msra.mxu0 %v779
    %v781 = vand.u32 %v576, 4294901760
    %782 = vmatpush.msra.mxu0 %v781
    %v783 = vand.u32 %v575, 4294901760
    %784 = vmatpush.msra.mxu0 %v783
    %v785 = vand.u32 %v574, 4294901760
    %786 = vmatpush.msra.mxu0 %v785
    %v787 = vand.u32 %v573, 4294901760
    %788 = vmatpush.msra.mxu0 %v787
    %v789 = vand.u32 %v572, 4294901760
    %790 = vmatpush.msra.mxu0 %v789
    %v791 = vand.u32 %v571, 4294901760
    %792 = vmatpush.msra.mxu0 %v791
    %v793 = vand.u32 %v570, 4294901760
    %794 = vmatpush.msra.mxu0 %v793
    %v795 = vand.u32 %v569, 4294901760
    %796 = vmatpush.msra.mxu0 %v795
    %v797 = vand.u32 %v568, 4294901760
    %798 = vmatpush.msra.mxu0 %v797
    %v799 = vand.u32 %v567, 4294901760
    %800 = vmatpush.msra.mxu0 %v799
    %v801 = vand.u32 %v566, 4294901760
    %802 = vmatpush.msra.mxu0 %v801
    %v803 = vand.u32 %v565, 4294901760
    %804 = vmatpush.msra.mxu0 %v803
    %v805 = vand.u32 %v564, 4294901760
    %806 = vmatpush.msra.mxu0 %v805
    %v807 = vand.u32 %v563, 4294901760
    %808 = vmatpush.msra.mxu0 %v807
    %v809 = vand.u32 %v562, 4294901760
    %810 = vmatpush.msra.mxu0 %v809
    %v811 = vand.u32 %v560, 4294901760
    %v812 = vsub.f32 %v560, %v811
    %v813 = vand.u32 %v812, 4294901760
    %814 = vmatmul.f32.gmra.mxu0 %v813
    %v815 = vpop.f32.mrf.mxu0
    %v816 = vadd.f32 %v777, %v815
    %817 = vdwg.mxu0
    %v818 = vand.u32 %v577, 4294901760
    %v819 = vsub.f32 %v577, %v818
    %v820 = vand.u32 %v819, 4294901760
    %821 = vmatpush.msra.mxu0 %v820
    %v822 = vand.u32 %v576, 4294901760
    %v823 = vsub.f32 %v576, %v822
    %v824 = vand.u32 %v823, 4294901760
    %825 = vmatpush.msra.mxu0 %v824
    %v826 = vand.u32 %v575, 4294901760
    %v827 = vsub.f32 %v575, %v826
    %v828 = vand.u32 %v827, 4294901760
    %829 = vmatpush.msra.mxu0 %v828
    %v830 = vand.u32 %v574, 4294901760
    %v831 = vsub.f32 %v574, %v830
    %v832 = vand.u32 %v831, 4294901760
    %833 = vmatpush.msra.mxu0 %v832
    %v834 = vand.u32 %v573, 4294901760
    %v835 = vsub.f32 %v573, %v834
    %v836 = vand.u32 %v835, 4294901760
    %837 = vmatpush.msra.mxu0 %v836
    %v838 = vand.u32 %v572, 4294901760
    %v839 = vsub.f32 %v572, %v838
    %v840 = vand.u32 %v839, 4294901760
    %841 = vmatpush.msra.mxu0 %v840
    %v842 = vand.u32 %v571, 4294901760
    %v843 = vsub.f32 %v571, %v842
    %v844 = vand.u32 %v843, 4294901760
    %845 = vmatpush.msra.mxu0 %v844
    %v846 = vand.u32 %v570, 4294901760
    %v847 = vsub.f32 %v570, %v846
    %v848 = vand.u32 %v847, 4294901760
    %849 = vmatpush.msra.mxu0 %v848
    %v850 = vand.u32 %v569, 4294901760
    %v851 = vsub.f32 %v569, %v850
    %v852 = vand.u32 %v851, 4294901760
    %853 = vmatpush.msra.mxu0 %v852
    %v854 = vand.u32 %v568, 4294901760
    %v855 = vsub.f32 %v568, %v854
    %v856 = vand.u32 %v855, 4294901760
    %857 = vmatpush.msra.mxu0 %v856
    %v858 = vand.u32 %v567, 4294901760
    %v859 = vsub.f32 %v567, %v858
    %v860 = vand.u32 %v859, 4294901760
    %861 = vmatpush.msra.mxu0 %v860
    %v862 = vand.u32 %v566, 4294901760
    %v863 = vsub.f32 %v566, %v862
    %v864 = vand.u32 %v863, 4294901760
    %865 = vmatpush.msra.mxu0 %v864
    %v866 = vand.u32 %v565, 4294901760
    %v867 = vsub.f32 %v565, %v866
    %v868 = vand.u32 %v867, 4294901760
    %869 = vmatpush.msra.mxu0 %v868
    %v870 = vand.u32 %v564, 4294901760
    %v871 = vsub.f32 %v564, %v870
    %v872 = vand.u32 %v871, 4294901760
    %873 = vmatpush.msra.mxu0 %v872
    %v874 = vand.u32 %v563, 4294901760
    %v875 = vsub.f32 %v563, %v874
    %v876 = vand.u32 %v875, 4294901760
    %877 = vmatpush.msra.mxu0 %v876
    %v878 = vand.u32 %v562, 4294901760
    %v879 = vsub.f32 %v562, %v878
    %v880 = vand.u32 %v879, 4294901760
    %881 = vmatpush.msra.mxu0 %v880
    %v882 = vand.u32 %v560, 4294901760
    %883 = vmatmul.f32.gmra.mxu0 %v882
    %v884 = vpop.f32.mrf.mxu0
    %v885 = vadd.f32 %v816, %v884
    %886 = vdwg.mxu0
    %v887 = vand.u32 %v577, 4294901760
    %888 = vmatpush.msra.mxu0 %v887
    %v889 = vand.u32 %v576, 4294901760
    %890 = vmatpush.msra.mxu0 %v889
    %v891 = vand.u32 %v575, 4294901760
    %892 = vmatpush.msra.mxu0 %v891
    %v893 = vand.u32 %v574, 4294901760
    %894 = vmatpush.msra.mxu0 %v893
    %v895 = vand.u32 %v573, 4294901760
    %896 = vmatpush.msra.mxu0 %v895
    %v897 = vand.u32 %v572, 4294901760
    %898 = vmatpush.msra.mxu0 %v897
    %v899 = vand.u32 %v571, 4294901760
    %900 = vmatpush.msra.mxu0 %v899
    %v901 = vand.u32 %v570, 4294901760
    %902 = vmatpush.msra.mxu0 %v901
    %v903 = vand.u32 %v569, 4294901760
    %904 = vmatpush.msra.mxu0 %v903
    %v905 = vand.u32 %v568, 4294901760
    %906 = vmatpush.msra.mxu0 %v905
    %v907 = vand.u32 %v567, 4294901760
    %908 = vmatpush.msra.mxu0 %v907
    %v909 = vand.u32 %v566, 4294901760
    %910 = vmatpush.msra.mxu0 %v909
    %v911 = vand.u32 %v565, 4294901760
    %912 = vmatpush.msra.mxu0 %v911
    %v913 = vand.u32 %v564, 4294901760
    %914 = vmatpush.msra.mxu0 %v913
    %v915 = vand.u32 %v563, 4294901760
    %916 = vmatpush.msra.mxu0 %v915
    %v917 = vand.u32 %v562, 4294901760
    %918 = vmatpush.msra.mxu0 %v917
    %v919 = vand.u32 %v560, 4294901760
    %920 = vmatmul.f32.gmra.mxu0 %v919
    %v921 = vpop.f32.mrf.mxu0
    %v922 = vadd.f32 %v885, %v921
    %923 = vdwg.mxu0
    %v924 = vmax.f32 %v922, 0.0
    %v925 = vld [vmem:[%s5] sm:$0xff]
    %v926 = vld [vmem:[%s5 + $0x8] sm:$0xff]
    %v927 = vld [vmem:[%s5 + $0x10] sm:$0xff]
    %v928 = vld [vmem:[%s5 + $0x18] sm:$0xff]
    %v929 = vld [vmem:[%s5 + $0x20] sm:$0xff]
    %v930 = vld [vmem:[%s5 + $0x28] sm:$0xff]
    %v931 = vld [vmem:[%s5 + $0x30] sm:$0xff]
    %v932 = vld [vmem:[%s5 + $0x38] sm:$0xff]
    %v933 = vld [vmem:[%s5 + $0x40] sm:$0xff]
    %v934 = vld [vmem:[%s5 + $0x48] sm:$0xff]
    %v935 = vld [vmem:[%s5 + $0x50] sm:$0xff]
    %v936 = vld [vmem:[%s5 + $0x58] sm:$0xff]
    %v937 = vld [vmem:[%s5 + $0x60] sm:$0xff]
    %v938 = vld [vmem:[%s5 + $0x68] sm:$0xff]
    %v939 = vld [vmem:[%s5 + $0x70] sm:$0xff]
    %v940 = vld [vmem:[%s5 + $0x78] sm:$0xff]
    %v941 = vld [vmem:[%s6] sm:$0x1]
    %v943 = vperm.slane %v941, 0
    %v945 = vand.u32 %v940, 4294901760
    %946 = vmatpush.msra.mxu0 %v945
    %v947 = vand.u32 %v939, 4294901760
    %948 = vmatpush.msra.mxu0 %v947
    %v949 = vand.u32 %v938, 4294901760
    %950 = vmatpush.msra.mxu0 %v949
    %v951 = vand.u32 %v937, 4294901760
    %952 = vmatpush.msra.mxu0 %v951
    %v953 = vand.u32 %v936, 4294901760
    %954 = vmatpush.msra.mxu0 %v953
    %v955 = vand.u32 %v935, 4294901760
    %956 = vmatpush.msra.mxu0 %v955
    %v957 = vand.u32 %v934, 4294901760
    %958 = vmatpush.msra.mxu0 %v957
    %v959 = vand.u32 %v933, 4294901760
    %960 = vmatpush.msra.mxu0 %v959
    %v961 = vand.u32 %v932, 4294901760
    %962 = vmatpush.msra.mxu0 %v961
    %v963 = vand.u32 %v931, 4294901760
    %964 = vmatpush.msra.mxu0 %v963
    %v965 = vand.u32 %v930, 4294901760
    %966 = vmatpush.msra.mxu0 %v965
    %v967 = vand.u32 %v929, 4294901760
    %968 = vmatpush.msra.mxu0 %v967
    %v969 = vand.u32 %v928, 4294901760
    %970 = vmatpush.msra.mxu0 %v969
    %v971 = vand.u32 %v927, 4294901760
    %972 = vmatpush.msra.mxu0 %v971
    %v973 = vand.u32 %v926, 4294901760
    %974 = vmatpush.msra.mxu0 %v973
    %v975 = vand.u32 %v925, 4294901760
    %976 = vmatpush.msra.mxu0 %v975
    %v977 = vand.u32 %v924, 4294901760
    %v978 = vsub.f32 %v924, %v977
    %v979 = vand.u32 %v978, 4294901760
    %v980 = vsub.f32 %v978, %v979
    %v981 = vand.u32 %v980, 4294901760
    %982 = vmatmul.f32.gmra.mxu0 %v981
    %v983 = vpop.f32.mrf.mxu0
    %v984 = vadd.f32 %v943, %v983
    %985 = vdwg.mxu0
    %v986 = vand.u32 %v940, 4294901760
    %v987 = vsub.f32 %v940, %v986
    %v988 = vand.u32 %v987, 4294901760
    %v989 = vsub.f32 %v987, %v988
    %v990 = vand.u32 %v989, 4294901760
    %991 = vmatpush.msra.mxu0 %v990
    %v992 = vand.u32 %v939, 4294901760
    %v993 = vsub.f32 %v939, %v992
    %v994 = vand.u32 %v993, 4294901760
    %v995 = vsub.f32 %v993, %v994
    %v996 = vand.u32 %v995, 4294901760
    %997 = vmatpush.msra.mxu0 %v996
    %v998 = vand.u32 %v938, 4294901760
    %v999 = vsub.f32 %v938, %v998
    %v1000 = vand.u32 %v999, 4294901760
    %v1001 = vsub.f32 %v999, %v1000
    %v1002 = vand.u32 %v1001, 4294901760
    %1003 = vmatpush.msra.mxu0 %v1002
    %v1004 = vand.u32 %v937, 4294901760
    %v1005 = vsub.f32 %v937, %v1004
    %v1006 = vand.u32 %v1005, 4294901760
    %v1007 = vsub.f32 %v1005, %v1006
    %v1008 = vand.u32 %v1007, 4294901760
    %1009 = vmatpush.msra.mxu0 %v1008
    %v1010 = vand.u32 %v936, 4294901760
    %v1011 = vsub.f32 %v936, %v1010
    %v1012 = vand.u32 %v1011, 4294901760
    %v1013 = vsub.f32 %v1011, %v1012
    %v1014 = vand.u32 %v1013, 4294901760
    %1015 = vmatpush.msra.mxu0 %v1014
    %v1016 = vand.u32 %v935, 4294901760
    %v1017 = vsub.f32 %v935, %v1016
    %v1018 = vand.u32 %v1017, 4294901760
    %v1019 = vsub.f32 %v1017, %v1018
    %v1020 = vand.u32 %v1019, 4294901760
    %1021 = vmatpush.msra.mxu0 %v1020
    %v1022 = vand.u32 %v934, 4294901760
    %v1023 = vsub.f32 %v934, %v1022
    %v1024 = vand.u32 %v1023, 4294901760
    %v1025 = vsub.f32 %v1023, %v1024
    %v1026 = vand.u32 %v1025, 4294901760
    %1027 = vmatpush.msra.mxu0 %v1026
    %v1028 = vand.u32 %v933, 4294901760
    %v1029 = vsub.f32 %v933, %v1028
    %v1030 = vand.u32 %v1029, 4294901760
    %v1031 = vsub.f32 %v1029, %v1030
    %v1032 = vand.u32 %v1031, 4294901760
    %1033 = vmatpush.msra.mxu0 %v1032
    %v1034 = vand.u32 %v932, 4294901760
    %v1035 = vsub.f32 %v932, %v1034
    %v1036 = vand.u32 %v1035, 4294901760
    %v1037 = vsub.f32 %v1035, %v1036
    %v1038 = vand.u32 %v1037, 4294901760
    %1039 = vmatpush.msra.mxu0 %v1038
    %v1040 = vand.u32 %v931, 4294901760
    %v1041 = vsub.f32 %v931, %v1040
    %v1042 = vand.u32 %v1041, 4294901760
    %v1043 = vsub.f32 %v1041, %v1042
    %v1044 = vand.u32 %v1043, 4294901760
    %1045 = vmatpush.msra.mxu0 %v1044
    %v1046 = vand.u32 %v930, 4294901760
    %v1047 = vsub.f32 %v930, %v1046
    %v1048 = vand.u32 %v1047, 4294901760
    %v1049 = vsub.f32 %v1047, %v1048
    %v1050 = vand.u32 %v1049, 4294901760
    %1051 = vmatpush.msra.mxu0 %v1050
    %v1052 = vand.u32 %v929, 4294901760
    %v1053 = vsub.f32 %v929, %v1052
    %v1054 = vand.u32 %v1053, 4294901760
    %v1055 = vsub.f32 %v1053, %v1054
    %v1056 = vand.u32 %v1055, 4294901760
    %1057 = vmatpush.msra.mxu0 %v1056
    %v1058 = vand.u32 %v928, 4294901760
    %v1059 = vsub.f32 %v928, %v1058
    %v1060 = vand.u32 %v1059, 4294901760
    %v1061 = vsub.f32 %v1059, %v1060
    %v1062 = vand.u32 %v1061, 4294901760
    %1063 = vmatpush.msra.mxu0 %v1062
    %v1064 = vand.u32 %v927, 4294901760
    %v1065 = vsub.f32 %v927, %v1064
    %v1066 = vand.u32 %v1065, 4294901760
    %v1067 = vsub.f32 %v1065, %v1066
    %v1068 = vand.u32 %v1067, 4294901760
    %1069 = vmatpush.msra.mxu0 %v1068
    %v1070 = vand.u32 %v926, 4294901760
    %v1071 = vsub.f32 %v926, %v1070
    %v1072 = vand.u32 %v1071, 4294901760
    %v1073 = vsub.f32 %v1071, %v1072
    %v1074 = vand.u32 %v1073, 4294901760
    %1075 = vmatpush.msra.mxu0 %v1074
    %v1076 = vand.u32 %v925, 4294901760
    %v1077 = vsub.f32 %v925, %v1076
    %v1078 = vand.u32 %v1077, 4294901760
    %v1079 = vsub.f32 %v1077, %v1078
    %v1080 = vand.u32 %v1079, 4294901760
    %1081 = vmatpush.msra.mxu0 %v1080
    %v1082 = vand.u32 %v924, 4294901760
    %1083 = vmatmul.f32.gmra.mxu0 %v1082
    %v1084 = vpop.f32.mrf.mxu0
    %v1085 = vadd.f32 %v984, %v1084
    %1086 = vdwg.mxu0
    %v1087 = vand.u32 %v940, 4294901760
    %v1088 = vsub.f32 %v940, %v1087
    %1089 = vmatpush.msra.mxu0 %v1088
    %v1090 = vand.u32 %v939, 4294901760
    %v1091 = vsub.f32 %v939, %v1090
    %1092 = vmatpush.msra.mxu0 %v1091
    %v1093 = vand.u32 %v938, 4294901760
    %v1094 = vsub.f32 %v938, %v1093
    %1095 = vmatpush.msra.mxu0 %v1094
    %v1096 = vand.u32 %v937, 4294901760
    %v1097 = vsub.f32 %v937, %v1096
    %1098 = vmatpush.msra.mxu0 %v1097
    %v1099 = vand.u32 %v936, 4294901760
    %v1100 = vsub.f32 %v936, %v1099
    %1101 = vmatpush.msra.mxu0 %v1100
    %v1102 = vand.u32 %v935, 4294901760
    %v1103 = vsub.f32 %v935, %v1102
    %1104 = vmatpush.msra.mxu0 %v1103
    %v1105 = vand.u32 %v934, 4294901760
    %v1106 = vsub.f32 %v934, %v1105
    %1107 = vmatpush.msra.mxu0 %v1106
    %v1108 = vand.u32 %v933, 4294901760
    %v1109 = vsub.f32 %v933, %v1108
    %1110 = vmatpush.msra.mxu0 %v1109
    %v1111 = vand.u32 %v932, 4294901760
    %v1112 = vsub.f32 %v932, %v1111
    %1113 = vmatpush.msra.mxu0 %v1112
    %v1114 = vand.u32 %v931, 4294901760
    %v1115 = vsub.f32 %v931, %v1114
    %1116 = vmatpush.msra.mxu0 %v1115
    %v1117 = vand.u32 %v930, 4294901760
    %v1118 = vsub.f32 %v930, %v1117
    %1119 = vmatpush.msra.mxu0 %v1118
    %v1120 = vand.u32 %v929, 4294901760
    %v1121 = vsub.f32 %v929, %v1120
    %1122 = vmatpush.msra.mxu0 %v1121
    %v1123 = vand.u32 %v928, 4294901760
    %v1124 = vsub.f32 %v928, %v1123
    %1125 = vmatpush.msra.mxu0 %v1124
    %v1126 = vand.u32 %v927, 4294901760
    %v1127 = vsub.f32 %v927, %v1126
    %1128 = vmatpush.msra.mxu0 %v1127
    %v1129 = vand.u32 %v926, 4294901760
    %v1130 = vsub.f32 %v926, %v1129
    %1131 = vmatpush.msra.mxu0 %v1130
    %v1132 = vand.u32 %v925, 4294901760
    %v1133 = vsub.f32 %v925, %v1132
    %1134 = vmatpush.msra.mxu0 %v1133
    %v1135 = vand.u32 %v924, 4294901760
    %v1136 = vsub.f32 %v924, %v1135
    %1137 = vmatmul.f32.gmra.mxu0 %v1136
    %v1138 = vpop.f32.mrf.mxu0
    %v1139 = vadd.f32 %v1085, %v1138
    %1140 = vdwg.mxu0
    %v1141 = vand.u32 %v940, 4294901760
    %1142 = vmatpush.msra.mxu0 %v1141
    %v1143 = vand.u32 %v939, 4294901760
    %1144 = vmatpush.msra.mxu0 %v1143
    %v1145 = vand.u32 %v938, 4294901760
    %1146 = vmatpush.msra.mxu0 %v1145
    %v1147 = vand.u32 %v937, 4294901760
    %1148 = vmatpush.msra.mxu0 %v1147
    %v1149 = vand.u32 %v936, 4294901760
    %1150 = vmatpush.msra.mxu0 %v1149
    %v1151 = vand.u32 %v935, 4294901760
    %1152 = vmatpush.msra.mxu0 %v1151
    %v1153 = vand.u32 %v934, 4294901760
    %1154 = vmatpush.msra.mxu0 %v1153
    %v1155 = vand.u32 %v933, 4294901760
    %1156 = vmatpush.msra.mxu0 %v1155
    %v1157 = vand.u32 %v932, 4294901760
    %1158 = vmatpush.msra.mxu0 %v1157
    %v1159 = vand.u32 %v931, 4294901760
    %1160 = vmatpush.msra.mxu0 %v1159
    %v1161 = vand.u32 %v930, 4294901760
    %1162 = vmatpush.msra.mxu0 %v1161
    %v1163 = vand.u32 %v929, 4294901760
    %1164 = vmatpush.msra.mxu0 %v1163
    %v1165 = vand.u32 %v928, 4294901760
    %1166 = vmatpush.msra.mxu0 %v1165
    %v1167 = vand.u32 %v927, 4294901760
    %1168 = vmatpush.msra.mxu0 %v1167
    %v1169 = vand.u32 %v926, 4294901760
    %1170 = vmatpush.msra.mxu0 %v1169
    %v1171 = vand.u32 %v925, 4294901760
    %1172 = vmatpush.msra.mxu0 %v1171
    %v1173 = vand.u32 %v924, 4294901760
    %v1174 = vsub.f32 %v924, %v1173
    %v1175 = vand.u32 %v1174, 4294901760
    %1176 = vmatmul.f32.gmra.mxu0 %v1175
    %v1177 = vpop.f32.mrf.mxu0
    %v1178 = vadd.f32 %v1139, %v1177
    %1179 = vdwg.mxu0
    %v1180 = vand.u32 %v940, 4294901760
    %v1181 = vsub.f32 %v940, %v1180
    %v1182 = vand.u32 %v1181, 4294901760
    %1183 = vmatpush.msra.mxu0 %v1182
    %v1184 = vand.u32 %v939, 4294901760
    %v1185 = vsub.f32 %v939, %v1184
    %v1186 = vand.u32 %v1185, 4294901760
    %1187 = vmatpush.msra.mxu0 %v1186
    %v1188 = vand.u32 %v938, 4294901760
    %v1189 = vsub.f32 %v938, %v1188
    %v1190 = vand.u32 %v1189, 4294901760
    %1191 = vmatpush.msra.mxu0 %v1190
    %v1192 = vand.u32 %v937, 4294901760
    %v1193 = vsub.f32 %v937, %v1192
    %v1194 = vand.u32 %v1193, 4294901760
    %1195 = vmatpush.msra.mxu0 %v1194
    %v1196 = vand.u32 %v936, 4294901760
    %v1197 = vsub.f32 %v936, %v1196
    %v1198 = vand.u32 %v1197, 4294901760
    %1199 = vmatpush.msra.mxu0 %v1198
    %v1200 = vand.u32 %v935, 4294901760
    %v1201 = vsub.f32 %v935, %v1200
    %v1202 = vand.u32 %v1201, 4294901760
    %1203 = vmatpush.msra.mxu0 %v1202
    %v1204 = vand.u32 %v934, 4294901760
    %v1205 = vsub.f32 %v934, %v1204
    %v1206 = vand.u32 %v1205, 4294901760
    %1207 = vmatpush.msra.mxu0 %v1206
    %v1208 = vand.u32 %v933, 4294901760
    %v1209 = vsub.f32 %v933, %v1208
    %v1210 = vand.u32 %v1209, 4294901760
    %1211 = vmatpush.msra.mxu0 %v1210
    %v1212 = vand.u32 %v932, 4294901760
    %v1213 = vsub.f32 %v932, %v1212
    %v1214 = vand.u32 %v1213, 4294901760
    %1215 = vmatpush.msra.mxu0 %v1214
    %v1216 = vand.u32 %v931, 4294901760
    %v1217 = vsub.f32 %v931, %v1216
    %v1218 = vand.u32 %v1217, 4294901760
    %1219 = vmatpush.msra.mxu0 %v1218
    %v1220 = vand.u32 %v930, 4294901760
    %v1221 = vsub.f32 %v930, %v1220
    %v1222 = vand.u32 %v1221, 4294901760
    %1223 = vmatpush.msra.mxu0 %v1222
    %v1224 = vand.u32 %v929, 4294901760
    %v1225 = vsub.f32 %v929, %v1224
    %v1226 = vand.u32 %v1225, 4294901760
    %1227 = vmatpush.msra.mxu0 %v1226
    %v1228 = vand.u32 %v928, 4294901760
    %v1229 = vsub.f32 %v928, %v1228
    %v1230 = vand.u32 %v1229, 4294901760
    %1231 = vmatpush.msra.mxu0 %v1230
    %v1232 = vand.u32 %v927, 4294901760
    %v1233 = vsub.f32 %v927, %v1232
    %v1234 = vand.u32 %v1233, 4294901760
    %1235 = vmatpush.msra.mxu0 %v1234
    %v1236 = vand.u32 %v926, 4294901760
    %v1237 = vsub.f32 %v926, %v1236
    %v1238 = vand.u32 %v1237, 4294901760
    %1239 = vmatpush.msra.mxu0 %v1238
    %v1240 = vand.u32 %v925, 4294901760
    %v1241 = vsub.f32 %v925, %v1240
    %v1242 = vand.u32 %v1241, 4294901760
    %1243 = vmatpush.msra.mxu0 %v1242
    %v1244 = vand.u32 %v924, 4294901760
    %1245 = vmatmul.f32.gmra.mxu0 %v1244
    %v1246 = vpop.f32.mrf.mxu0
    %v1247 = vadd.f32 %v1178, %v1246
    %1248 = vdwg.mxu0
    %v1249 = vand.u32 %v940, 4294901760
    %1250 = vmatpush.msra.mxu0 %v1249
    %v1251 = vand.u32 %v939, 4294901760
    %1252 = vmatpush.msra.mxu0 %v1251
    %v1253 = vand.u32 %v938, 4294901760
    %1254 = vmatpush.msra.mxu0 %v1253
    %v1255 = vand.u32 %v937, 4294901760
    %1256 = vmatpush.msra.mxu0 %v1255
    %v1257 = vand.u32 %v936, 4294901760
    %1258 = vmatpush.msra.mxu0 %v1257
    %v1259 = vand.u32 %v935, 4294901760
    %1260 = vmatpush.msra.mxu0 %v1259
    %v1261 = vand.u32 %v934, 4294901760
    %1262 = vmatpush.msra.mxu0 %v1261
    %v1263 = vand.u32 %v933, 4294901760
    %1264 = vmatpush.msra.mxu0 %v1263
    %v1265 = vand.u32 %v932, 4294901760
    %1266 = vmatpush.msra.mxu0 %v1265
    %v1267 = vand.u32 %v931, 4294901760
    %1268 = vmatpush.msra.mxu0 %v1267
    %v1269 = vand.u32 %v930, 4294901760
    %1270 = vmatpush.msra.mxu0 %v1269
    %v1271 = vand.u32 %v929, 4294901760
    %1272 = vmatpush.msra.mxu0 %v1271
    %v1273 = vand.u32 %v928, 4294901760
    %1274 = vmatpush.msra.mxu0 %v1273
    %v1275 = vand.u32 %v927, 4294901760
    %1276 = vmatpush.msra.mxu0 %v1275
    %v1277 = vand.u32 %v926, 4294901760
    %1278 = vmatpush.msra.mxu0 %v1277
    %v1279 = vand.u32 %v925, 4294901760
    %1280 = vmatpush.msra.mxu0 %v1279
    %v1281 = vand.u32 %v924, 4294901760
    %1282 = vmatmul.f32.gmra.mxu0 %v1281
    %v1283 = vpop.f32.mrf.mxu0
    %v1284 = vadd.f32 %v1247, %v1283
    %1285 = vdwg.mxu0
    %vm1286 = vcmask 261120
    %1287 = vst.msk [vmem:[%s7] sm:$0xff] %vm1286, %v1284
    // Predicated region
    $region34: #{patch_embed.1} parent=1 // pred_check
      _
    $region35: #{patch_embed.1} parent=1 // pred_check_branch
      %1289 = sbr.rel (0) target = $region37
    $region36: #{patch_embed.1} parent=1 // pred_region
      _
    $region37: #{patch_embed.1} parent=1 // pred_fallthru
      _
    // Predicated region
    $region38: #{patch_embed.1} parent=1 // pred_check
      _
    $region39: #{patch_embed.1} parent=1 // pred_check_branch
      %1291 = sbr.rel (0) target = $region41
    $region40: #{patch_embed.1} parent=1 // pred_region
      _
    $region41: #{patch_embed.1} parent=1 // pred_fallthru
      _
    %1292 = vsyncpa [#allocation3], 1

</llo_original>
